<compile_context>
chip_gen: v6e
topology: v6e:2x2x1
jax: 0.10.0
libtpu: 0.0.40
codegen_flags: <defaults>
</compile_context>

<pallas_src>
import functools

import jax
import jax.numpy as jnp
import numpy as np
from jax.experimental import pallas as pl
from jax.experimental.pallas import tpu as pltpu


def _round_up(n, m):
    return ((n + m - 1) // m) * m


# ----------------------------------------------------------------------------
# In-kernel KAN layer, transposed ("features x rows") so the row tile is lane-dense.
#   actT  : (din, R)                activations, rows in the lane axis
#   knots : (din, G + 2k + 1)       uniform extended grid per input feature
#   wT    : (dout, din*(1 + G + k)) stacked [wb ; ws] weights, transposed
# Returns (dout, R) float32.
# ----------------------------------------------------------------------------
def _kan_layer_T(actT, knots, wT, *, k, inv_h):
    din = actT.shape[0]
    xi = actT[:, None, :]                                   # (din, 1, R)
    gi = knots[:, :, None]                                  # (din, L, 1)
    # order-0 indicator basis
    b = ((xi >= gi[:, :-1, :]) & (xi < gi[:, 1:, :])).astype(jnp.float32)
    # Cox-de Boor recursion; uniform grid => every denominator equals p*h, replaced by a
    # multiply with the constant reciprocal (no divides).
    for p in range(1, k + 1):
        inv = inv_h / p
        b = ((xi - gi[:, :-(p + 1), :]) * inv) * b[:, :-1, :] \
            + ((gi[:, (p + 1):, :] - xi) * inv) * b[:, 1:, :]
    # (din, G+k, R) -> (din*(G+k), R): pure sublane concat (free when G+k is a multiple of 8)
    basisT = jnp.concatenate([b[i] for i in range(din)], axis=0)
    featT = jnp.concatenate([jax.nn.silu(actT), basisT], axis=0)
    return jnp.dot(wT, featT, preferred_element_type=jnp.float32)   # (dout, R)


# ----------------------------------------------------------------------------
# Kernel 1 (tiny, one-off): Q-side contribution of the main KAN's first layer.
# cat([Q, x]) in the first layer is exactly separable per input feature; the Q part is
# batch-independent so it is hoisted out of the main grid and computed once here.
# ----------------------------------------------------------------------------
def q_table_kernel(qfeat_ref, knots_ref, w_ref, o_ref, *, k, inv_h):
    o_ref[...] = _kan_layer_T(qfeat_ref[...], knots_ref[...], w_ref[...], k=k, inv_h=inv_h)


def q_table(q_featT, knots_q, wqT, *, k, inv_h):
    d1, nq = wqT.shape[0], q_featT.shape[1]
    return pl.pallas_call(
        functools.partial(q_table_kernel, k=k, inv_h=inv_h),
        out_shape=jax.ShapeDtypeStruct((d1, nq), jnp.float32),
        grid=(1,),
        in_specs=[pl.BlockSpec(q_featT.shape, lambda i: (0, 0)),
                  pl.BlockSpec(knots_q.shape, lambda i: (0, 0)),
                  pl.BlockSpec(wqT.shape, lambda i: (0, 0))],
        out_specs=pl.BlockSpec((d1, nq), lambda i: (0, 0)),
    )(q_featT, knots_q, wqT)


# ----------------------------------------------------------------------------
# Kernel 2: the whole SQ_KAN_cos forward for one batch row-tile.
# Ref order: xT, mT, bfoldT, cosqT, q_rep, [aug (knots, wT)]*, knots_x, wxT,
#            [rest (knots, wT)]*, out.
# Main-KAN rows are ordered q-major: column q*TB + b  <->  q_params row (b, q).
# ----------------------------------------------------------------------------
def fused_forward_kernel(*refs, n_aug, n_rest, k, inv_h_aug, inv_h_x,
                         inv_h_rest, nQ, multiplier):
    x_ref, m_ref, bfold_ref, cosq_ref, qrep_ref = refs[:5]
    pos = 5
    aug_refs = refs[pos:pos + 2 * n_aug]; pos += 2 * n_aug
    knx_ref, wx_ref = refs[pos:pos + 2]; pos += 2
    rest_refs = refs[pos:pos + 2 * n_rest]; pos += 2 * n_rest
    o_ref = refs[pos]

    xT = x_ref[...]                                         # (d_in, TB)
    tb = xT.shape[1]

    # Folded background projection: bg_lin.T = (A @ P).T @ x.T + (B @ P).T
    bg_linT = jnp.dot(m_ref[...], xT, preferred_element_type=jnp.float32) + bfold_ref[...]

    # Augmentation KAN (rows stay in the lane axis the whole way)
    actT = xT
    for li in range(n_aug):
        actT = _kan_layer_T(actT, aug_refs[2 * li][...], aug_refs[2 * li + 1][...],
                            k=k, inv_h=inv_h_aug[li])       # -> (d_x, TB)

    # x-side of the main KAN's first layer; the hoisted Q-side table arrives via q_rep
    x_outT = _kan_layer_T(actT, knx_ref[...], wx_ref[...], k=k, inv_h=inv_h_x)  # (d1, TB)

    # Implicit cat([Q, x]) of the first layer (q-major rows); q_params never hits HBM
    hT = jnp.concatenate([x_outT] * nQ, axis=1) + qrep_ref[...]                 # (d1, nQ*TB)

    gT = hT
    for li in range(n_rest):
        gT = _kan_layer_T(gT, rest_refs[2 * li][...], rest_refs[2 * li + 1][...],
                          k=k, inv_h=inv_h_rest[li])                            # (2, nQ*TB)

    # Fused cos-modulated combine: the lane-sparse (rows, 2) activation never reaches HBM
    g1 = jnp.concatenate([gT[0:1, q * tb:(q + 1) * tb] for q in range(nQ)], axis=0)  # (nQ, TB)
    g2 = jnp.concatenate([gT[1:2, q * tb:(q + 1) * tb] for q in range(nQ)], axis=0)
    o_ref[...] = (g1 * cosq_ref[...] + g2) * multiplier + bg_linT                    # (nQ, TB)


# ----------------------------------------------------------------------------
# Tiling & wrapper
# ----------------------------------------------------------------------------
def _pick_tile(batch, nQ, *, rows_cap=2048, tb_max=512):
    """Pick (tile, padded_batch): either one full-width step, or lane-aligned (x128) tiles
    with >=2 grid steps so the second TensorCore on v7x gets work.  nQ*tile <= rows_cap keeps
    the main-KAN intermediates comfortably inside scoped VMEM on every generation."""
    b8 = _round_up(max(batch, 1), 8)
    cap = max(128, min(tb_max, ((rows_cap // max(nQ, 1)) // 128) * 128))
    if b8 <= cap:
        return b8, b8
    tb = min(cap, _round_up(pl.cdiv(b8, 2), 128))
    return tb, _round_up(b8, tb)


def sq_kan_cos_forward(x, params):
    cfg = params["cfg"]
    k, nQ, multiplier = cfg["k"], cfg["nQ"], cfg["multiplier"]
    batch, d_in = x.shape
    tb, b_pad = _pick_tile(batch, nQ)

    # (a) hoisted, grid-invariant Q-side table of the main KAN's first layer
    knots_q, wqT, inv_hq = params["first_q"]
    q_tab = q_table(params["q_featT"], knots_q, wqT, k=k, inv_h=inv_hq)   # (d1, nQ)
    q_rep = jnp.repeat(q_tab, tb, axis=1)                                  # (d1, nQ*tb), q-major

    # (b) fused whole-forward kernel over batch tiles (activations live in VMEM only)
    xT = jnp.asarray(x, jnp.float32).T
    if b_pad != batch:
        xT = jnp.pad(xT, ((0, 0), (0, b_pad - batch)))

    aug, rest = params["kan_aug"], params["kan_rest"]
    knots_x, wxT, inv_hx = params["first_x"]
    operands = [xT, params["mT"], params["bfoldT"], params["cosqT"], q_rep]
    for kn, wT, _ in aug:
        operands += [kn, wT]
    operands += [knots_x, wxT]
    for kn, wT, _ in rest:
        operands += [kn, wT]

    in_specs = [pl.BlockSpec((d_in, tb), lambda i: (0, i))]
    in_specs += [pl.BlockSpec(a.shape, lambda i: (0, 0)) for a in operands[1:]]

    # Scheduler hint: count the padded problem including the b_pad*nQ main-KAN rows.
    rows_main = b_pad * nQ
    flops = 2 * b_pad * d_in * nQ
    trans = 0
    for kn, wT, _ in aug:
        flops += b_pad * (2 * wT.shape[0] * wT.shape[1] + 8 * kn.size)
        trans += b_pad * kn.shape[0]
    flops += b_pad * (2 * wxT.shape[0] * wxT.shape[1] + 8 * knots_x.size)
    trans += b_pad * knots_x.shape[0]
    for kn, wT, _ in rest:
        flops += rows_main * (2 * wT.shape[0] * wT.shape[1] + 8 * kn.size)
        trans += rows_main * kn.shape[0]
    bytes_accessed = 4 * (sum(int(np.prod(a.shape)) for a in operands) + nQ * b_pad)

    kernel = functools.partial(
        fused_forward_kernel,
        n_aug=len(aug), n_rest=len(rest), k=k,
        inv_h_aug=tuple(ih for _, _, ih in aug), inv_h_x=inv_hx,
        inv_h_rest=tuple(ih for _, _, ih in rest),
        nQ=nQ, multiplier=multiplier)

    outT = pl.pallas_call(
        kernel,
        out_shape=jax.ShapeDtypeStruct((nQ, b_pad), jnp.float32),
        grid=(b_pad // tb,),
        in_specs=in_specs,
        out_specs=pl.BlockSpec((nQ, tb), lambda i: (0, i)),
        compiler_params=pltpu.CompilerParams(
            dimension_semantics=("parallel",),
            vmem_limit_bytes=32 * 1024 * 1024),
        cost_estimate=pl.CostEstimate(flops=int(flops), transcendentals=int(trans),
                                      bytes_accessed=int(bytes_accessed)),
    )(*operands)

    return outT[:, :batch].T                                # (batch, nQ)


# ----------------------------------------------------------------------------
# Parameter setup (deterministic, synthetic)
# ----------------------------------------------------------------------------
def make_extended_grid(din, G, k, lo=-1.0, hi=1.0):
    hstep = (hi - lo) / G
    pts = lo - k * hstep + hstep * jnp.arange(G + 2 * k + 1, dtype=jnp.float32)
    return jnp.tile(pts[None, :], (din, 1)), hstep          # (din, G + 2k + 1), scalar h


def init_kan(widths, G, k, key, scale=0.1):
    layers = []
    for din, dout in zip(widths[:-1], widths[1:]):
        key, k1, k2 = jax.random.split(key, 3)
        wb = scale * jax.random.normal(k1, (din, dout), jnp.float32)
        ws = scale * jax.random.normal(k2, (din, G + k, dout), jnp.float32)
        knots, hstep = make_extended_grid(din, G, k)
        layers.append((knots, wb, ws, hstep))
    return layers


def stack_weights_T(wb, ws):
    din, nb, dout = ws.shape
    return jnp.concatenate([wb, ws.reshape(din * nb, dout)], axis=0).T   # (dout, din*(1+nb))


def pack_params(raw_aug, raw_main, A, Bvec, Qx, Qx_inv, Q_train, Q_train_scale,
                d_x, multiplier, k, nQ):
    assert raw_main[0][1].shape[0] == 2 * d_x, "main KAN input width must be 2*d_x"
    kan_aug = [(kn, stack_weights_T(wb, ws), 1.0 / h) for kn, wb, ws, h in raw_aug]
    kn0, wb0, ws0, h0 = raw_main[0]
    first_q = (kn0[:d_x], stack_weights_T(wb0[:d_x], ws0[:d_x]), 1.0 / h0)
    first_x = (kn0[d_x:], stack_weights_T(wb0[d_x:], ws0[d_x:]), 1.0 / h0)
    kan_rest = [(kn, stack_weights_T(wb, ws), 1.0 / h) for kn, wb, ws, h in raw_main[1:]]
    # fold the bg linear chain (x @ A + B) @ Qx_inv.T @ Qx.T into one matrix + bias
    P = Qx_inv.T @ Qx.T                                      # (nQ, nQ)
    return dict(
        kan_aug=kan_aug, first_q=first_q, first_x=first_x, kan_rest=kan_rest,
        mT=(A @ P).T, bfoldT=(Bvec @ P).T,
        cosqT=jnp.cos(2.0 * np.pi * Q_train)[:, None],
        q_featT=jnp.tile(Q_train_scale[None, :], (d_x, 1)),
        cfg=dict(multiplier=float(multiplier), k=int(k), nQ=int(nQ)),
    )


# ----------------------------------------------------------------------------
# Pure-JAX reference (per-feature Cox-de Boor with divisions, explicit q_params, unfused bg)
# ----------------------------------------------------------------------------
def _ref_kan_layer(x, knots, wb, ws, k):
    din = x.shape[1]
    acc = jax.nn.silu(x) @ wb
    for i in range(din):
        xi = x[:, i:i + 1]
        gi = knots[i:i + 1, :]
        b = ((xi >= gi[:, :-1]) & (xi < gi[:, 1:])).astype(jnp.float32)
        for p in range(1, k + 1):
            b = (xi - gi[:, :-(p + 1)]) / (gi[:, p:-1] - gi[:, :-(p + 1)]) * b[:, :-1] \
                + (gi[:, p + 1:] - xi) / (gi[:, p + 1:] - gi[:, 1:-p]) * b[:, 1:]
        acc = acc + b @ ws[i]
    return acc


def _ref_forward(x, raw_aug, raw_main, A, Bvec, Qx, Qx_inv, Q_train, Q_train_scale,
                 multiplier, k):
    bg = x @ A + Bvec
    bg_lin = (Qx @ (Qx_inv @ bg.T)).T
    act = x
    for knots, wb, ws, _ in raw_aug:
        act = _ref_kan_layer(act, knots, wb, ws, k)
    batch, d_x = act.shape
    nQ = Q_train.shape[0]
    x_exp = jnp.broadcast_to(act[:, None, :], (batch, nQ, d_x))
    q_exp = jnp.broadcast_to(Q_train_scale[None, :, None], (batch, nQ, d_x))
    qp = jnp.concatenate([q_exp, x_exp], axis=-1).reshape(batch * nQ, 2 * d_x)
    g = qp
    for knots, wb, ws, _ in raw_main:
        g = _ref_kan_layer(g, knots, wb, ws, k)
    g = g.reshape(batch, nQ, 2)
    sq = g[..., 0] * jnp.cos(2.0 * np.pi * Q_train)[None, :] + g[..., 1]
    return sq * multiplier + bg_lin


if __name__ == "__main__":
    # small shapes consistent with the module's forward
    batch, d_in, nQ, nB, d_x = 8, 4, 16, 4, 4
    G, k_order = 5, 3
    multiplier = 0.5
    Q_scale = 1.0 / 4.0

    key = jax.random.PRNGKey(0)
    k_x, k_qx, k_aug, k_main, k_ab = jax.random.split(key, 5)

    x = jax.random.normal(k_x, (batch, d_in), jnp.float32)

    # Q_train vector and its scaled version (Q_torch / Q_torch_scale in the module)
    Q_train = jnp.linspace(0.5, 4.0, nQ, dtype=jnp.float32)
    Q_train_scale = (Q_train - 2.0) * Q_scale

    # Qx and its pseudo-inverse (host-side numpy pinv, as in the reference module)
    Qx_np = np.asarray(jax.random.normal(k_qx, (nQ, nB), jnp.float32))
    Qx = jnp.asarray(Qx_np, jnp.float32)
    Qx_inv = jnp.asarray(np.linalg.pinv(Qx_np).astype(np.float32))

    # A, B are zero-initialized in the reference module; use small nonzero values here so
    # the folded background projection path is actually exercised by the correctness check.
    kA, kB = jax.random.split(k_ab)
    A = 0.1 * jax.random.normal(kA, (d_in, nQ), jnp.float32)
    Bvec = 0.1 * jax.random.normal(kB, (1, nQ), jnp.float32)

    # KAN widths: kan_aug maps d_in -> d_x ; main kan maps 2*d_x -> 2
    raw_aug = init_kan([d_in, 8, d_x], G, k_order, k_aug)
    raw_main = init_kan([2 * d_x, 16, 2], G, k_order, k_main)

    params = pack_params(raw_aug, raw_main, A, Bvec, Qx, Qx_inv, Q_train,
                         Q_train_scale, d_x, multiplier, k_order, nQ)

    out = sq_kan_cos_forward(x, params)
    jax.block_until_ready(out)
    assert out.shape == (batch, nQ) and out.dtype == jnp.float32

    ref = _ref_forward(x, raw_aug, raw_main, A, Bvec, Qx, Qx_inv,
                       Q_train, Q_train_scale, multiplier, k_order)
    err = float(jnp.max(jnp.abs(out - ref)))
    assert err < 1e-3, f"mismatch vs reference: {err}"
    print("KERNEL_OK")
</pallas_src>

<mosaic_0001>
module attributes {stable_mosaic.version = 11 : i64} {
  func.func @q_table_kernel(%arg0: i32, %arg1: memref<4x16xf32, #tpu.memory_space<vmem>>, %arg2: memref<4x12xf32, #tpu.memory_space<vmem>>, %arg3: memref<16x36xf32, #tpu.memory_space<vmem>>, %arg4: memref<16x16xf32, #tpu.memory_space<vmem>>) attributes {dimension_semantics = [#tpu.dimension_semantics<arbitrary>], iteration_bounds = array<i64: 1>, scalar_prefetch = 0 : i64, scratch_operands = 0 : i64, tpu.core_type = #tpu.core_type<tc>, window_params = [{pipeline_mode = #tpu.pipeline_mode<synchronous>, transform_indices = @transform_0, window_bounds = array<i64: 4, 16>}, {pipeline_mode = #tpu.pipeline_mode<synchronous>, transform_indices = @transform_1, window_bounds = array<i64: 4, 12>}, {pipeline_mode = #tpu.pipeline_mode<synchronous>, transform_indices = @transform_2, window_bounds = array<i64: 16, 36>}, {pipeline_mode = #tpu.pipeline_mode<synchronous>, transform_indices = @transform_3, window_bounds = array<i64: 16, 16>}]} {
    %c0 = arith.constant 0 : index
    %c0_0 = arith.constant 0 : index
    %0 = vector.load %arg1[%c0, %c0_0] : memref<4x16xf32, #tpu.memory_space<vmem>>, vector<4x16xf32>
    %c0_1 = arith.constant 0 : index
    %c0_2 = arith.constant 0 : index
    %1 = vector.load %arg2[%c0_1, %c0_2] : memref<4x12xf32, #tpu.memory_space<vmem>>, vector<4x12xf32>
    %c0_3 = arith.constant 0 : index
    %c0_4 = arith.constant 0 : index
    %2 = vector.load %arg3[%c0_3, %c0_4] : memref<16x36xf32, #tpu.memory_space<vmem>>, vector<16x36xf32>
    %3 = vector.shape_cast %0 : vector<4x16xf32> to vector<4x1x16xf32>
    %4 = vector.shape_cast %1 : vector<4x12xf32> to vector<4x12x1xf32>
    %5 = vector.extract_strided_slice %4 {offsets = [0, 0, 0], sizes = [4, 11, 1], strides = [1, 1, 1]} : vector<4x12x1xf32> to vector<4x11x1xf32>
    %6 = vector.broadcast %3 : vector<4x1x16xf32> to vector<4x11x16xf32>
    %7 = vector.broadcast %5 : vector<4x11x1xf32> to vector<4x11x16xf32>
    %8 = arith.cmpf oge, %6, %7 : vector<4x11x16xf32>
    %9 = vector.extract_strided_slice %4 {offsets = [0, 1, 0], sizes = [4, 11, 1], strides = [1, 1, 1]} : vector<4x12x1xf32> to vector<4x11x1xf32>
    %10 = vector.broadcast %3 : vector<4x1x16xf32> to vector<4x11x16xf32>
    %11 = vector.broadcast %9 : vector<4x11x1xf32> to vector<4x11x16xf32>
    %12 = arith.cmpf olt, %10, %11 : vector<4x11x16xf32>
    %13 = arith.andi %8, %12 : vector<4x11x16xi1>
    %14 = arith.extui %13 : vector<4x11x16xi1> to vector<4x11x16xi32>
    %15 = arith.sitofp %14 : vector<4x11x16xi32> to vector<4x11x16xf32>
    %16 = vector.extract_strided_slice %4 {offsets = [0, 0, 0], sizes = [4, 10, 1], strides = [1, 1, 1]} : vector<4x12x1xf32> to vector<4x10x1xf32>
    %17 = vector.broadcast %3 : vector<4x1x16xf32> to vector<4x10x16xf32>
    %18 = vector.broadcast %16 : vector<4x10x1xf32> to vector<4x10x16xf32>
    %19 = arith.subf %17, %18 : vector<4x10x16xf32>
    %cst = arith.constant 2.500000e+00 : f32
    %20 = vector.broadcast %cst : f32 to vector<4x10x16xf32>
    %21 = arith.mulf %19, %20 : vector<4x10x16xf32>
    %22 = vector.extract_strided_slice %15 {offsets = [0, 0, 0], sizes = [4, 10, 16], strides = [1, 1, 1]} : vector<4x11x16xf32> to vector<4x10x16xf32>
    %23 = arith.mulf %21, %22 : vector<4x10x16xf32>
    %24 = vector.extract_strided_slice %4 {offsets = [0, 2, 0], sizes = [4, 10, 1], strides = [1, 1, 1]} : vector<4x12x1xf32> to vector<4x10x1xf32>
    %25 = vector.broadcast %24 : vector<4x10x1xf32> to vector<4x10x16xf32>
    %26 = vector.broadcast %3 : vector<4x1x16xf32> to vector<4x10x16xf32>
    %27 = arith.subf %25, %26 : vector<4x10x16xf32>
    %cst_5 = arith.constant 2.500000e+00 : f32
    %28 = vector.broadcast %cst_5 : f32 to vector<4x10x16xf32>
    %29 = arith.mulf %27, %28 : vector<4x10x16xf32>
    %30 = vector.extract_strided_slice %15 {offsets = [0, 1, 0], sizes = [4, 10, 16], strides = [1, 1, 1]} : vector<4x11x16xf32> to vector<4x10x16xf32>
    %31 = arith.mulf %29, %30 : vector<4x10x16xf32>
    %32 = arith.addf %23, %31 : vector<4x10x16xf32>
    %33 = vector.extract_strided_slice %4 {offsets = [0, 0, 0], sizes = [4, 9, 1], strides = [1, 1, 1]} : vector<4x12x1xf32> to vector<4x9x1xf32>
    %34 = vector.broadcast %3 : vector<4x1x16xf32> to vector<4x9x16xf32>
    %35 = vector.broadcast %33 : vector<4x9x1xf32> to vector<4x9x16xf32>
    %36 = arith.subf %34, %35 : vector<4x9x16xf32>
    %cst_6 = arith.constant 1.250000e+00 : f32
    %37 = vector.broadcast %cst_6 : f32 to vector<4x9x16xf32>
    %38 = arith.mulf %36, %37 : vector<4x9x16xf32>
    %39 = vector.extract_strided_slice %32 {offsets = [0, 0, 0], sizes = [4, 9, 16], strides = [1, 1, 1]} : vector<4x10x16xf32> to vector<4x9x16xf32>
    %40 = arith.mulf %38, %39 : vector<4x9x16xf32>
    %41 = vector.extract_strided_slice %4 {offsets = [0, 3, 0], sizes = [4, 9, 1], strides = [1, 1, 1]} : vector<4x12x1xf32> to vector<4x9x1xf32>
    %42 = vector.broadcast %41 : vector<4x9x1xf32> to vector<4x9x16xf32>
    %43 = vector.broadcast %3 : vector<4x1x16xf32> to vector<4x9x16xf32>
    %44 = arith.subf %42, %43 : vector<4x9x16xf32>
    %cst_7 = arith.constant 1.250000e+00 : f32
    %45 = vector.broadcast %cst_7 : f32 to vector<4x9x16xf32>
    %46 = arith.mulf %44, %45 : vector<4x9x16xf32>
    %47 = vector.extract_strided_slice %32 {offsets = [0, 1, 0], sizes = [4, 9, 16], strides = [1, 1, 1]} : vector<4x10x16xf32> to vector<4x9x16xf32>
    %48 = arith.mulf %46, %47 : vector<4x9x16xf32>
    %49 = arith.addf %40, %48 : vector<4x9x16xf32>
    %50 = vector.extract_strided_slice %4 {offsets = [0, 0, 0], sizes = [4, 8, 1], strides = [1, 1, 1]} : vector<4x12x1xf32> to vector<4x8x1xf32>
    %51 = vector.broadcast %3 : vector<4x1x16xf32> to vector<4x8x16xf32>
    %52 = vector.broadcast %50 : vector<4x8x1xf32> to vector<4x8x16xf32>
    %53 = arith.subf %51, %52 : vector<4x8x16xf32>
    %cst_8 = arith.constant 0.833333313 : f32
    %54 = vector.broadcast %cst_8 : f32 to vector<4x8x16xf32>
    %55 = arith.mulf %53, %54 : vector<4x8x16xf32>
    %56 = vector.extract_strided_slice %49 {offsets = [0, 0, 0], sizes = [4, 8, 16], strides = [1, 1, 1]} : vector<4x9x16xf32> to vector<4x8x16xf32>
    %57 = arith.mulf %55, %56 : vector<4x8x16xf32>
    %58 = vector.extract_strided_slice %4 {offsets = [0, 4, 0], sizes = [4, 8, 1], strides = [1, 1, 1]} : vector<4x12x1xf32> to vector<4x8x1xf32>
    %59 = vector.broadcast %58 : vector<4x8x1xf32> to vector<4x8x16xf32>
    %60 = vector.broadcast %3 : vector<4x1x16xf32> to vector<4x8x16xf32>
    %61 = arith.subf %59, %60 : vector<4x8x16xf32>
    %cst_9 = arith.constant 0.833333313 : f32
    %62 = vector.broadcast %cst_9 : f32 to vector<4x8x16xf32>
    %63 = arith.mulf %61, %62 : vector<4x8x16xf32>
    %64 = vector.extract_strided_slice %49 {offsets = [0, 1, 0], sizes = [4, 8, 16], strides = [1, 1, 1]} : vector<4x9x16xf32> to vector<4x8x16xf32>
    %65 = arith.mulf %63, %64 : vector<4x8x16xf32>
    %66 = arith.addf %57, %65 : vector<4x8x16xf32>
    %67 = vector.extract_strided_slice %66 {offsets = [0, 0, 0], sizes = [1, 8, 16], strides = [1, 1, 1]} : vector<4x8x16xf32> to vector<1x8x16xf32>
    %68 = vector.shape_cast %67 : vector<1x8x16xf32> to vector<8x16xf32>
    %69 = vector.extract_strided_slice %66 {offsets = [1, 0, 0], sizes = [1, 8, 16], strides = [1, 1, 1]} : vector<4x8x16xf32> to vector<1x8x16xf32>
    %70 = vector.shape_cast %69 : vector<1x8x16xf32> to vector<8x16xf32>
    %71 = vector.extract_strided_slice %66 {offsets = [2, 0, 0], sizes = [1, 8, 16], strides = [1, 1, 1]} : vector<4x8x16xf32> to vector<1x8x16xf32>
    %72 = vector.shape_cast %71 : vector<1x8x16xf32> to vector<8x16xf32>
    %73 = vector.extract_strided_slice %66 {offsets = [3, 0, 0], sizes = [1, 8, 16], strides = [1, 1, 1]} : vector<4x8x16xf32> to vector<1x8x16xf32>
    %74 = vector.shape_cast %73 : vector<1x8x16xf32> to vector<8x16xf32>
    %75 = tpu.concatenate %68, %70, %72, %74 in 0 : vector<8x16xf32>, vector<8x16xf32>, vector<8x16xf32>, vector<8x16xf32> -> vector<32x16xf32>
    %76 = arith.negf %0 : vector<4x16xf32>
    %77 = math.exp %76 : vector<4x16xf32>
    %cst_10 = arith.constant 1.000000e+00 : f32
    %78 = vector.broadcast %cst_10 : f32 to vector<4x16xf32>
    %79 = arith.addf %78, %77 : vector<4x16xf32>
    %80 = arith.divf %78, %79 : vector<4x16xf32>
    %81 = arith.mulf %0, %80 : vector<4x16xf32>
    %82 = tpu.concatenate %81, %75 in 0 : vector<4x16xf32>, vector<32x16xf32> -> vector<36x16xf32>
    %cst_11 = arith.constant dense<0.000000e+00> : vector<16x16xf32>
    %83 = tpu.matmul %2, %82, %cst_11 {dimension_numbers = #tpu.dot_dimension_numbers<[1], [0], [0], [1], [0, 0, 1, 1], [], []>} : vector<16x36xf32>, vector<36x16xf32>, vector<16x16xf32> -> vector<16x16xf32>
    %c0_12 = arith.constant 0 : index
    %c0_13 = arith.constant 0 : index
    %84 = vector.load %arg4[%c0_12, %c0_13] : memref<16x16xf32, #tpu.memory_space<vmem>>, vector<16x16xf32>
    tpu.vector_store %arg4[%c0_12, %c0_13], %83 {strides = array<i32>} : memref<16x16xf32, #tpu.memory_space<vmem>>, vector<16x16xf32>,
    return
  }
  func.func @transform_0(%arg0: i32) -> (i32, i32) {
    %c0_i32 = arith.constant 0 : i32
    %c0_i32_0 = arith.constant 0 : i32
    %c0_i32_1 = arith.constant 0 : i32
    return %c0_i32, %c0_i32_0 : i32, i32
  }
  func.func @transform_1(%arg0: i32) -> (i32, i32) {
    %c0_i32 = arith.constant 0 : i32
    %c0_i32_0 = arith.constant 0 : i32
    %c0_i32_1 = arith.constant 0 : i32
    return %c0_i32, %c0_i32_0 : i32, i32
  }
  func.func @transform_2(%arg0: i32) -> (i32, i32) {
    %c0_i32 = arith.constant 0 : i32
    %c0_i32_0 = arith.constant 0 : i32
    %c0_i32_1 = arith.constant 0 : i32
    return %c0_i32, %c0_i32_0 : i32, i32
  }
  func.func @transform_3(%arg0: i32) -> (i32, i32) {
    %c0_i32 = arith.constant 0 : i32
    %c0_i32_0 = arith.constant 0 : i32
    %c0_i32_1 = arith.constant 0 : i32
    return %c0_i32, %c0_i32_0 : i32, i32
  }
}

</mosaic_0001>

<llo_original>
// kernel: tpu_custom_call.1
$region0: #{tpu_custom_call.1}
  #allocation0 [shape = 'u32[]', space=smem, size = 0x4, offset = 0x4, fixed_abs, tag = 'smem constant byte address 0x4 - core index']
  #allocation1 [shape = 'u32[144,128]{1,0:T(1,128)}', space=vmem, size = 0x12000, scoped, tag = 'internal scratch']
  %s0 = inlined_call_operand.hbm [shape: f32[4,16], index: 0, kind: input, shape index: {}]
  %s1 = inlined_call_operand.hbm [shape: f32[4,12], index: 1, kind: input, shape index: {}]
  %s2 = inlined_call_operand.hbm [shape: f32[16,36], index: 2, kind: input, shape index: {}]
  %s3 = inlined_call_operand.hbm [shape: f32[16,16], index: 3, kind: output, shape index: {}]
  %s4 = sld [smem:[#allocation0]]
  $region34: #{tpu_custom_call.1} parent=0
    _
  %s6 = ssub.s32 1, %s4
  %s7 = scalar_select 0, %s6, %s4
  $region1: #{tpu_custom_call.1} parent=0
    #allocation2 [shape = 'u8[2048]{0}', space=vmem, size = 0x800, scoped, tag = 'input window, operand 0, single buffered']
    #allocation3 [shape = 's32[1]{0}', space=sflag, size = 0x4, scoped, tag = 'scoped memory for tpu_custom_call.1']
    #allocation4 [shape = 's32[1]{0}', space=sflag, size = 0x4, scoped, tag = 'scoped memory for tpu_custom_call.1']
    #allocation5 [shape = 'u8[2048]{0}', space=vmem, size = 0x800, scoped, tag = 'input window, operand 1, single buffered']
    #allocation6 [shape = 's32[1]{0}', space=sflag, size = 0x4, scoped, tag = 'scoped memory for tpu_custom_call.1']
    #allocation7 [shape = 'u8[8192]{0}', space=vmem, size = 0x2000, scoped, tag = 'input window, operand 2, single buffered']
    #allocation8 [shape = 'u8[8192]{0}', space=vmem, size = 0x2000, scoped, tag = 'output window, operand 0, single buffered']
    %8 = vsyncpa [#allocation3], 0
    %9 = vsyncpa [#allocation6], 0
    %10 = vsyncpa [#allocation4], 0
    // Predicated region
    $region2: #{tpu_custom_call.1} parent=1 // pred_check
      _
    $region3: #{tpu_custom_call.1} parent=1 // pred_check_branch
      %12 = sbr.rel (0) target = $region5
    $region4: #{tpu_custom_call.1} parent=1 // pred_region
      %s14 = ssub.s32 64, 64
      %15 = vsyncadd [#allocation3], %s14
      %s17 = sshll.u32 [#allocation2], 4
      %s18 = int_to_ptr.vmem [resolvable:$true] %s17
      %20 = dma.hbm_to_vmem [thread:$0]  %s0, 64, %s18, [#allocation3]
    $region5: #{tpu_custom_call.1} parent=1 // pred_fallthru
      _
    // Predicated region
    $region6: #{tpu_custom_call.1} parent=1 // pred_check
      _
    $region7: #{tpu_custom_call.1} parent=1 // pred_check_branch
      %22 = sbr.rel (0) target = $region9
    $region8: #{tpu_custom_call.1} parent=1 // pred_region
      %s24 = ssub.s32 64, 64
      %25 = vsyncadd [#allocation6], %s24
      %s27 = sshll.u32 [#allocation5], 4
      %s28 = int_to_ptr.vmem [resolvable:$true] %s27
      %30 = dma.hbm_to_vmem [thread:$0]  %s1, 64, %s28, [#allocation6]
    $region9: #{tpu_custom_call.1} parent=1 // pred_fallthru
      _
    // Predicated region
    $region10: #{tpu_custom_call.1} parent=1 // pred_check
      _
    $region11: #{tpu_custom_call.1} parent=1 // pred_check_branch
      %32 = sbr.rel (0) target = $region13
    $region12: #{tpu_custom_call.1} parent=1 // pred_region
      %s34 = ssub.s32 256, 256
      %35 = vsyncadd [#allocation6], %s34
      %s36 = sshll.u32 [#allocation7], 4
      %s37 = int_to_ptr.vmem [resolvable:$true] %s36
      %42 = dma.hbm_to_vmem [thread:$0]  %s2, 256, %s37, [#allocation6], 128, 128, 8
    $region13: #{tpu_custom_call.1} parent=1 // pred_fallthru
      _
    // Predicated region
    $region14: #{tpu_custom_call.1} parent=1 // pred_check
      _
    $region15: #{tpu_custom_call.1} parent=1 // pred_check_branch
      %44 = sbr.rel (0) target = $region17
    $region16: #{tpu_custom_call.1} parent=1 // pred_region
      %45 = dma.done [#allocation3], 64
    $region17: #{tpu_custom_call.1} parent=1 // pred_fallthru
      _
    // Predicated region
    $region18: #{tpu_custom_call.1} parent=1 // pred_check
      _
    $region19: #{tpu_custom_call.1} parent=1 // pred_check_branch
      %47 = sbr.rel (0) target = $region21
    $region20: #{tpu_custom_call.1} parent=1 // pred_region
      %48 = dma.done [#allocation6], 64
    $region21: #{tpu_custom_call.1} parent=1 // pred_fallthru
      _
    // Predicated region
    $region22: #{tpu_custom_call.1} parent=1 // pred_check
      _
    $region23: #{tpu_custom_call.1} parent=1 // pred_check_branch
      %50 = sbr.rel (0) target = $region25
    $region24: #{tpu_custom_call.1} parent=1 // pred_region
      %51 = dma.done [#allocation6], 256
    $region25: #{tpu_custom_call.1} parent=1 // pred_fallthru
      _
    %v52 = vld [vmem:[#allocation2] sm:$0xf]
    %v53 = vld [vmem:[#allocation5] sm:$0xf]
    %v54 = vld [vmem:[#allocation7] sm:$0xff]
    %v55 = vld [vmem:[#allocation7 + $0x8] sm:$0xff]
    %v58 = vunpack.c.l.s4 1966171168
    %v59 = vunpack.c.0.s8 %v58
    %v60 = vlaneseq
    %v61 = vshrl.u32 %v60, 7
    %v62 = vsub.s32 %v59, %v61
    %v63 = vrot.slane %v52, %v62
    %v64 = vcombine.high %v63, %v63
    %v66 = vunpack.c.l.s4 1966171168
    %v67 = vunpack.c.0.s8 %v66
    %v68 = vlaneseq
    %v69 = vshrl.u32 %v68, 7
    %v70 = vsub.s32 %v67, %v69
    %v71 = vrot.slane %v63, %v70
    %v73 = vunpack.c.l.s4 1966171168
    %v74 = vunpack.c.0.s8 %v73
    %v75 = vlaneseq
    %v76 = vshrl.u32 %v75, 7
    %v77 = vsub.s32 %v74, %v76
    %v78 = vrot.slane %v64, %v77
    %v79 = vcombine.high %v71, %v71
    %v80 = vcombine.high %v78, %v78
    %v81 = vlaneseq
    %v82 = vshrl.u32 %v81, 7
    %v83 = vsub.s32 0, %v82
    %v84 = vrot.slane %v53, %v83
    %86 = vbcast.lane.b32.xlu0 %v84, 256
    %v87 = vpop.permute.xlu0 %86
    %s89 = sor.u32 256, 8
    %90 = vbcast.lane.b32.xlu0 %v84, %s89
    %v91 = vpop.permute.xlu0 %90
    %v92 = vlaneseq
    %v93 = vshrl.u32 %v92, 7
    %v94 = vsub.s32 1, %v93
    %v95 = vrot.slane %v53, %v94
    %97 = vbcast.lane.b32.xlu0 %v95, 256
    %v98 = vpop.permute.xlu0 %97
    %s100 = sor.u32 256, 8
    %101 = vbcast.lane.b32.xlu0 %v95, %s100
    %v102 = vpop.permute.xlu0 %101
    %v103 = vlaneseq
    %v104 = vshrl.u32 %v103, 7
    %v105 = vsub.s32 2, %v104
    %v106 = vrot.slane %v53, %v105
    %108 = vbcast.lane.b32.xlu0 %v106, 256
    %v109 = vpop.permute.xlu0 %108
    %s111 = sor.u32 256, 8
    %112 = vbcast.lane.b32.xlu0 %v106, %s111
    %v113 = vpop.permute.xlu0 %112
    %v114 = vlaneseq
    %v115 = vshrl.u32 %v114, 7
    %v116 = vsub.s32 3, %v115
    %v117 = vrot.slane %v53, %v116
    %119 = vbcast.lane.b32.xlu0 %v117, 256
    %v120 = vpop.permute.xlu0 %119
    %s122 = sor.u32 256, 8
    %123 = vbcast.lane.b32.xlu0 %v117, %s122
    %v124 = vpop.permute.xlu0 %123
    %v125 = vlaneseq
    %v126 = vshrl.u32 %v125, 7
    %v127 = vsub.s32 0, %v126
    %v128 = vrot.slane %v71, %v127
    %v129 = vlaneseq
    %v130 = vshrl.u32 %v129, 7
    %v131 = vsub.s32 0, %v130
    %v132 = vrot.slane %v78, %v131
    %v133 = vlaneseq
    %v134 = vshrl.u32 %v133, 7
    %v135 = vsub.s32 0, %v134
    %v136 = vrot.slane %v79, %v135
    %v137 = vlaneseq
    %v138 = vshrl.u32 %v137, 7
    %v139 = vsub.s32 0, %v138
    %v140 = vrot.slane %v80, %v139
    %vm145 = vcmp.ge.f32.partialorder %v128, %v87
    %vm146 = vcmp.ge.f32.partialorder %v128, %v91
    %vm147 = vcmp.ge.f32.partialorder %v132, %v98
    %vm148 = vcmp.ge.f32.partialorder %v132, %v102
    %vm149 = vcmp.ge.f32.partialorder %v136, %v109
    %vm150 = vcmp.ge.f32.partialorder %v136, %v113
    %vm151 = vcmp.ge.f32.partialorder %v140, %v120
    %vm152 = vcmp.ge.f32.partialorder %v140, %v124
    %vm153 = vcmp.lt.f32.partialorder %v128, %v87
    %vm154 = vcmp.lt.f32.partialorder %v128, %v91
    %vm155 = vcmp.lt.f32.partialorder %v132, %v98
    %vm156 = vcmp.lt.f32.partialorder %v132, %v102
    %vm157 = vcmp.lt.f32.partialorder %v136, %v109
    %vm158 = vcmp.lt.f32.partialorder %v136, %v113
    %vm159 = vcmp.lt.f32.partialorder %v140, %v120
    %vm160 = vcmp.lt.f32.partialorder %v140, %v124
    %v161 = vsel %vm153, 1, 0
    %v162 = vsel %vm154, 1, 0
    %v163 = vsel %vm155, 1, 0
    %v164 = vsel %vm156, 1, 0
    %v165 = vsel %vm157, 1, 0
    %v166 = vsel %vm158, 1, 0
    %v167 = vsel %vm159, 1, 0
    %v168 = vsel %vm160, 1, 0
    %vm169 = vcmask 1046528
    %v170 = vrot.slane %v161, 1
    %v171 = vrot.slane %v162, 1
    %v172 = vsel %vm169, %v170, %v171
    %v173 = vrot.slane %v163, 1
    %v174 = vrot.slane %v164, 1
    %v175 = vsel %vm169, %v173, %v174
    %v176 = vrot.slane %v165, 1
    %v177 = vrot.slane %v166, 1
    %v178 = vsel %vm169, %v176, %v177
    %v179 = vrot.slane %v167, 1
    %v180 = vrot.slane %v168, 1
    %v181 = vsel %vm169, %v179, %v180
    %vm182 = vcmp.ne.s32.totalorder %v172, 0
    %vm183 = vcmp.ne.s32.totalorder %v171, 0
    %vm184 = vcmp.ne.s32.totalorder %v175, 0
    %vm185 = vcmp.ne.s32.totalorder %v174, 0
    %vm186 = vcmp.ne.s32.totalorder %v178, 0
    %vm187 = vcmp.ne.s32.totalorder %v177, 0
    %vm188 = vcmp.ne.s32.totalorder %v181, 0
    %vm189 = vcmp.ne.s32.totalorder %v180, 0
    %vm190 = vmand %vm145, %vm182
    %vm191 = vmand %vm146, %vm183
    %vm192 = vmand %vm147, %vm184
    %vm193 = vmand %vm148, %vm185
    %vm194 = vmand %vm149, %vm186
    %vm195 = vmand %vm150, %vm187
    %vm196 = vmand %vm151, %vm188
    %vm197 = vmand %vm152, %vm189
    %v198 = vsel %vm190, 1, 0
    %v199 = vsel %vm191, 1, 0
    %v200 = vsel %vm192, 1, 0
    %v201 = vsel %vm193, 1, 0
    %v202 = vsel %vm194, 1, 0
    %v203 = vsel %vm195, 1, 0
    %v204 = vsel %vm196, 1, 0
    %v205 = vsel %vm197, 1, 0
    %v206 = vcvt.s32.f32 %v198
    %v207 = vcvt.s32.f32 %v199
    %v208 = vcvt.s32.f32 %v200
    %v209 = vcvt.s32.f32 %v201
    %v210 = vcvt.s32.f32 %v202
    %v211 = vcvt.s32.f32 %v203
    %v212 = vcvt.s32.f32 %v204
    %v213 = vcvt.s32.f32 %v205
    %v214 = vsub.f32 %v128, %v87
    %v215 = vsub.f32 %v128, %v91
    %v216 = vsub.f32 %v132, %v98
    %v217 = vsub.f32 %v132, %v102
    %v218 = vsub.f32 %v136, %v109
    %v219 = vsub.f32 %v136, %v113
    %v220 = vsub.f32 %v140, %v120
    %v221 = vsub.f32 %v140, %v124
    %v222 = vmul.f32 %v214, 2.5
    %v223 = vmul.f32 %v215, 2.5
    %v224 = vmul.f32 %v216, 2.5
    %v225 = vmul.f32 %v217, 2.5
    %v226 = vmul.f32 %v218, 2.5
    %v227 = vmul.f32 %v219, 2.5
    %v228 = vmul.f32 %v220, 2.5
    %v229 = vmul.f32 %v221, 2.5
    %v230 = vmul.f32 %v222, %v206
    %v231 = vmul.f32 %v223, %v207
    %v232 = vmul.f32 %v224, %v208
    %v233 = vmul.f32 %v225, %v209
    %v234 = vmul.f32 %v226, %v210
    %v235 = vmul.f32 %v227, %v211
    %v236 = vmul.f32 %v228, %v212
    %v237 = vmul.f32 %v229, %v213
    %v238 = vsub.f32 %v87, %v128
    %v239 = vsub.f32 %v91, %v128
    %v240 = vsub.f32 %v98, %v132
    %v241 = vsub.f32 %v102, %v132
    %v242 = vsub.f32 %v109, %v136
    %v243 = vsub.f32 %v113, %v136
    %v244 = vsub.f32 %v120, %v140
    %v245 = vsub.f32 %v124, %v140
    %v246 = vmul.f32 %v238, 2.5
    %v247 = vmul.f32 %v239, 2.5
    %v248 = vmul.f32 %v240, 2.5
    %v249 = vmul.f32 %v241, 2.5
    %v250 = vmul.f32 %v242, 2.5
    %v251 = vmul.f32 %v243, 2.5
    %v252 = vmul.f32 %v244, 2.5
    %v253 = vmul.f32 %v245, 2.5
    %vm262 = vcmask 1040384
    %v263 = vrot.slane %v206, 7
    %v264 = vrot.slane %v207, 7
    %v265 = vsel %vm262, %v263, %v264
    %v266 = vrot.slane %v208, 7
    %v267 = vrot.slane %v209, 7
    %v268 = vsel %vm262, %v266, %v267
    %v269 = vrot.slane %v210, 7
    %v270 = vrot.slane %v211, 7
    %v271 = vsel %vm262, %v269, %v270
    %v272 = vrot.slane %v212, 7
    %v273 = vrot.slane %v213, 7
    %v274 = vsel %vm262, %v272, %v273
    %v283 = vmul.f32 %v246, %v263
    %v284 = vmul.f32 %v247, %v265
    %v285 = vmul.f32 %v248, %v266
    %v286 = vmul.f32 %v249, %v268
    %v287 = vmul.f32 %v250, %v269
    %v288 = vmul.f32 %v251, %v271
    %v289 = vmul.f32 %v252, %v272
    %v290 = vmul.f32 %v253, %v274
    %vm299 = vcmask 1045504
    %v300 = vrot.slane %v283, 2
    %v301 = vrot.slane %v284, 2
    %v302 = vsel %vm299, %v300, %v301
    %v303 = vrot.slane %v285, 2
    %v304 = vrot.slane %v286, 2
    %v305 = vsel %vm299, %v303, %v304
    %v306 = vrot.slane %v287, 2
    %v307 = vrot.slane %v288, 2
    %v308 = vsel %vm299, %v306, %v307
    %v309 = vrot.slane %v289, 2
    %v310 = vrot.slane %v290, 2
    %v311 = vsel %vm299, %v309, %v310
    %v320 = vadd.f32 %v230, %v302
    %v321 = vadd.f32 %v231, %v301
    %v322 = vadd.f32 %v232, %v305
    %v323 = vadd.f32 %v233, %v304
    %v324 = vadd.f32 %v234, %v308
    %v325 = vadd.f32 %v235, %v307
    %v326 = vadd.f32 %v236, %v311
    %v327 = vadd.f32 %v237, %v310
    %v328 = vmul.f32 %v214, 1.25
    %v329 = vmul.f32 %v215, 1.25
    %v330 = vmul.f32 %v216, 1.25
    %v331 = vmul.f32 %v217, 1.25
    %v332 = vmul.f32 %v218, 1.25
    %v333 = vmul.f32 %v219, 1.25
    %v334 = vmul.f32 %v220, 1.25
    %v335 = vmul.f32 %v221, 1.25
    %v336 = vmul.f32 %v328, %v320
    %v337 = vmul.f32 %v329, %v321
    %v338 = vmul.f32 %v330, %v322
    %v339 = vmul.f32 %v331, %v323
    %v340 = vmul.f32 %v332, %v324
    %v341 = vmul.f32 %v333, %v325
    %v342 = vmul.f32 %v334, %v326
    %v343 = vmul.f32 %v335, %v327
    %v344 = vmul.f32 %v238, 1.25
    %v345 = vmul.f32 %v239, 1.25
    %v346 = vmul.f32 %v240, 1.25
    %v347 = vmul.f32 %v241, 1.25
    %v348 = vmul.f32 %v242, 1.25
    %v349 = vmul.f32 %v243, 1.25
    %v350 = vmul.f32 %v244, 1.25
    %v351 = vmul.f32 %v245, 1.25
    %vm360 = vcmask 1041408
    %v361 = vrot.slane %v320, 6
    %v362 = vrot.slane %v321, 6
    %v363 = vsel %vm360, %v361, %v362
    %v364 = vrot.slane %v322, 6
    %v365 = vrot.slane %v323, 6
    %v366 = vsel %vm360, %v364, %v365
    %v367 = vrot.slane %v324, 6
    %v368 = vrot.slane %v325, 6
    %v369 = vsel %vm360, %v367, %v368
    %v370 = vrot.slane %v326, 6
    %v371 = vrot.slane %v327, 6
    %v372 = vsel %vm360, %v370, %v371
    %v381 = vmul.f32 %v344, %v361
    %v382 = vmul.f32 %v345, %v363
    %v383 = vmul.f32 %v346, %v364
    %v384 = vmul.f32 %v347, %v366
    %v385 = vmul.f32 %v348, %v367
    %v386 = vmul.f32 %v349, %v369
    %v387 = vmul.f32 %v350, %v370
    %v388 = vmul.f32 %v351, %v372
    %vm397 = vcmask 1044480
    %v398 = vrot.slane %v381, 3
    %v399 = vrot.slane %v382, 3
    %v400 = vsel %vm397, %v398, %v399
    %v401 = vrot.slane %v383, 3
    %v402 = vrot.slane %v384, 3
    %v403 = vsel %vm397, %v401, %v402
    %v404 = vrot.slane %v385, 3
    %v405 = vrot.slane %v386, 3
    %v406 = vsel %vm397, %v404, %v405
    %v407 = vrot.slane %v387, 3
    %v408 = vrot.slane %v388, 3
    %v409 = vsel %vm397, %v407, %v408
    %v418 = vadd.f32 %v336, %v400
    %v419 = vadd.f32 %v337, %v399
    %v420 = vadd.f32 %v338, %v403
    %v421 = vadd.f32 %v339, %v402
    %v422 = vadd.f32 %v340, %v406
    %v423 = vadd.f32 %v341, %v405
    %v424 = vadd.f32 %v342, %v409
    %v425 = vadd.f32 %v343, %v408
    %v426 = vmul.f32 %v214, 0.8333333
    %v427 = vmul.f32 %v216, 0.8333333
    %v428 = vmul.f32 %v218, 0.8333333
    %v429 = vmul.f32 %v220, 0.8333333
    %v430 = vmul.f32 %v426, %v418
    %v431 = vmul.f32 %v427, %v420
    %v432 = vmul.f32 %v428, %v422
    %v433 = vmul.f32 %v429, %v424
    %v434 = vmul.f32 %v238, 0.8333333
    %v435 = vmul.f32 %v239, 0.8333333
    %v436 = vmul.f32 %v240, 0.8333333
    %v437 = vmul.f32 %v241, 0.8333333
    %v438 = vmul.f32 %v242, 0.8333333
    %v439 = vmul.f32 %v243, 0.8333333
    %v440 = vmul.f32 %v244, 0.8333333
    %v441 = vmul.f32 %v245, 0.8333333
    %vm450 = vcmask 1042432
    %v451 = vrot.slane %v418, 5
    %v452 = vrot.slane %v419, 5
    %v453 = vsel %vm450, %v451, %v452
    %v454 = vrot.slane %v420, 5
    %v455 = vrot.slane %v421, 5
    %v456 = vsel %vm450, %v454, %v455
    %v457 = vrot.slane %v422, 5
    %v458 = vrot.slane %v423, 5
    %v459 = vsel %vm450, %v457, %v458
    %v460 = vrot.slane %v424, 5
    %v461 = vrot.slane %v425, 5
    %v462 = vsel %vm450, %v460, %v461
    %v471 = vmul.f32 %v434, %v451
    %v472 = vmul.f32 %v435, %v453
    %v473 = vmul.f32 %v436, %v454
    %v474 = vmul.f32 %v437, %v456
    %v475 = vmul.f32 %v438, %v457
    %v476 = vmul.f32 %v439, %v459
    %v477 = vmul.f32 %v440, %v460
    %v478 = vmul.f32 %v441, %v462
    %vm487 = vcmask 1043456
    %v488 = vrot.slane %v471, 4
    %v489 = vrot.slane %v472, 4
    %v490 = vsel %vm487, %v488, %v489
    %v491 = vrot.slane %v473, 4
    %v492 = vrot.slane %v474, 4
    %v493 = vsel %vm487, %v491, %v492
    %v494 = vrot.slane %v475, 4
    %v495 = vrot.slane %v476, 4
    %v496 = vsel %vm487, %v494, %v495
    %v497 = vrot.slane %v477, 4
    %v498 = vrot.slane %v478, 4
    %v499 = vsel %vm487, %v497, %v498
    %v504 = vadd.f32 %v430, %v490
    %v505 = vadd.f32 %v431, %v493
    %v506 = vadd.f32 %v432, %v496
    %v507 = vadd.f32 %v433, %v499
    %v508 = vxor.u32 %v52, 2147483648
    %v509 = vmul.f32 %v508, 1.442695
    %v510 = vpow.pop %v509
    %v511 = vadd.f32 %v510, 1.0
    %v512 = vrcp.pop %v511
    %v513 = vmul.f32 1.0, %v512
    %v514 = vmul.f32 %v52, %v513
    %v519 = vrot.slane %v504, 4
    %v520 = vrot.slane %v505, 4
    %v521 = vsel %vm487, %v519, %v520
    %v522 = vrot.slane %v506, 4
    %v523 = vsel %vm487, %v520, %v522
    %v524 = vrot.slane %v507, 4
    %v525 = vsel %vm487, %v522, %v524
    %v530 = vsel %vm487, %v514, %v519
    %vm531 = vcmask 293888
    %v533 = vsel %vm531, %v54, 0
    %v536 = vsel %vm531, %v55, 0
    %v538 = vsel %vm487, %v524, 0
    %540 = vmatprep.subr.mxu0 0.0
    %541 = vmatpush1.msra.mxu0 0.0
    %542 = vmatprep.subr.mxu0 0.0
    %543 = vmatpush1.msra.mxu0 0.0
    %544 = vmatprep.subr.mxu0 0.0
    %545 = vmatpush1.msra.mxu0 0.0
    %546 = vmatprep.subr.mxu0 0.0
    %547 = vmatpush1.msra.mxu0 0.0
    %548 = vmatprep.subr.mxu0 0.0
    %549 = vmatpush1.msra.mxu0 0.0
    %550 = vmatprep.subr.mxu0 0.0
    %551 = vmatpush1.msra.mxu0 0.0
    %552 = vmatprep.subr.mxu0 0.0
    %553 = vmatpush1.msra.mxu0 0.0
    %554 = vmatprep.subr.mxu0 0.0
    %555 = vmatpush1.msra.mxu0 0.0
    %556 = vmatprep.subr.mxu0 0.0
    %557 = vmatpush1.msra.mxu0 0.0
    %558 = vmatprep.subr.mxu0 0.0
    %559 = vmatpush1.msra.mxu0 0.0
    %560 = vmatprep.subr.mxu0 0.0
    %561 = vmatpush1.msra.mxu0 0.0
    %562 = vmatprep.subr.mxu0 0.0
    %563 = vmatpush1.msra.mxu0 %v538
    %564 = vmatprep.subr.mxu0 0.0
    %565 = vmatpush1.msra.mxu0 %v525
    %566 = vmatprep.subr.mxu0 0.0
    %567 = vmatpush1.msra.mxu0 %v523
    %568 = vmatprep.subr.mxu0 0.0
    %569 = vmatpush1.msra.mxu0 %v521
    %570 = vmatprep.subr.mxu0 0.0
    %571 = vmatpush1.msra.mxu0 %v530
    %572 = vmatprep.subr.mxu0 0.0
    %573 = vmatpush2.msra.mxu0 0.0
    %574 = vmatprep.subr.mxu0 0.0
    %575 = vmatpush2.msra.mxu0 0.0
    %576 = vmatprep.subr.mxu0 0.0
    %577 = vmatpush2.msra.mxu0 0.0
    %578 = vmatprep.subr.mxu0 0.0
    %579 = vmatpush2.msra.mxu0 0.0
    %580 = vmatprep.subr.mxu0 0.0
    %581 = vmatpush2.msra.mxu0 0.0
    %582 = vmatprep.subr.mxu0 0.0
    %583 = vmatpush2.msra.mxu0 0.0
    %584 = vmatprep.subr.mxu0 0.0
    %585 = vmatpush2.msra.mxu0 0.0
    %586 = vmatprep.subr.mxu0 0.0
    %587 = vmatpush2.msra.mxu0 0.0
    %588 = vmatprep.subr.mxu0 0.0
    %589 = vmatpush2.msra.mxu0 0.0
    %590 = vmatprep.subr.mxu0 0.0
    %591 = vmatpush2.msra.mxu0 0.0
    %592 = vmatprep.subr.mxu0 0.0
    %593 = vmatpush2.msra.mxu0 0.0
    %594 = vmatprep.subr.mxu0 0.0
    %595 = vmatpush2.msra.mxu0 0.0
    %596 = vmatprep.subr.mxu0 0.0
    %597 = vmatpush2.msra.mxu0 0.0
    %598 = vmatprep.subr.mxu0 0.0
    %599 = vmatpush2.msra.mxu0 0.0
    %600 = vmatprep.subr.mxu0 0.0
    %601 = vmatpush2.msra.mxu0 0.0
    %602 = vmatprep.subr.mxu0 0.0
    %603 = vmatpush2.msra.mxu0 0.0
    %604 = vmatprep.mubr.f32.mxu0 0.0
    %605 = vmatmul.mubr.f32.gmra.mxu0 %v533
    %v606 = vpop.f32.mrf.mxu0
    %v607 = vadd.f32 0.0, %v606
    %v608 = vpop.f32.mrf.mxu0
    %609 = vmatprep.mubr.f32.mxu0 0.0
    %610 = vmatmul.mubr.f32.gmra.mxu0 %v536
    %v611 = vpop.f32.mrf.mxu0
    %v612 = vadd.f32 0.0, %v611
    %v613 = vpop.f32.mrf.mxu0
    %614 = vdwg.mxu0
    %vm615 = vcmask 130048
    %616 = vst.msk [vmem:[#allocation8] sm:$0xff] %vm615, %v607
    %617 = vst.msk [vmem:[#allocation8 + $0x8] sm:$0xff] %vm615, %v612
    // Predicated region
    $region26: #{tpu_custom_call.1} parent=1 // pred_check
      _
    $region27: #{tpu_custom_call.1} parent=1 // pred_check_branch
      %619 = sbr.rel (0) target = $region29
    $region28: #{tpu_custom_call.1} parent=1 // pred_region
      %s621 = ssub.s32 256, 256
      %622 = vsyncadd [#allocation4], %s621
      %s623 = sshll.u32 [#allocation8], 4
      %s624 = int_to_ptr.vmem [resolvable:$true] %s623
      %629 = dma.vmem_to_hbm [thread:$0]  %s624, 256, %s3, [#allocation4], 128, 128, 8
    $region29: #{tpu_custom_call.1} parent=1 // pred_fallthru
      _
    // Predicated region
    $region30: #{tpu_custom_call.1} parent=1 // pred_check
      _
    $region31: #{tpu_custom_call.1} parent=1 // pred_check_branch
      %631 = sbr.rel (0) target = $region33
    $region32: #{tpu_custom_call.1} parent=1 // pred_region
      %632 = dma.done [#allocation4], 256
    $region33: #{tpu_custom_call.1} parent=1 // pred_fallthru
      _
    %633 = vsyncpa [#allocation3], 1
    %634 = vsyncpa [#allocation6], 1
    %635 = vsyncpa [#allocation4], 1

</llo_original>
